<compile_context>
chip_gen: v7x
topology: tpu7x:2x2x1
jax: 0.10.0
libtpu: 0.0.40
codegen_flags: <defaults>
</compile_context>

<pallas_src>
import functools

import jax
import jax.numpy as jnp
from jax.experimental import pallas as pl
from jax.experimental.pallas import tpu as pltpu


_TAP_MAX = 16   # stride==1: unrolled-tap precompute up to this kernel_size


def _round_up(n, m):
    return ((n + m - 1) // m) * m


def _vmem_sizes():
    """(working-set budget, vmem_limit_bytes) sized per TPU generation."""
    phys = None
    try:
        phys = getattr(pltpu.get_tpu_info(), "vmem_capacity_bytes", None)
    except Exception:
        phys = None
    if phys is None:
        phys = 64 * 1024 * 1024                      # conservative (v7x-sized)
    if phys >= 120 * 1024 * 1024:                    # v5e / v6e: 128 MiB VMEM
        return 96 * 1024 * 1024, 110 * 1024 * 1024
    return 40 * 1024 * 1024, 48 * 1024 * 1024        # v7x: 64 MiB VMEM


def _moving_avg_kernel(*refs, kernel_size, stride, pad_front, l_in,
                       time_tile, out_len_p, mode, t_axis):
    if mode == "band":
        x_ref, band_ref, o_ref, xp_ref = refs
        work_ref = None
    else:
        x_ref, o_ref, xp_ref, work_ref = refs
        band_ref = None

    lanes = x_ref.shape[1]
    sl = xp_ref.shape[0]
    t = pl.program_id(t_axis)
    inv_k = 1.0 / kernel_size

    # One-time prep per lane tile (the time axis is the innermost grid axis).
    @pl.when(t == 0)
    def _prep():
        # Replication-padded f32 series, built by slice stores (no concat copy).
        xp_ref[pl.ds(pad_front, l_in), :] = x_ref[...].astype(jnp.float32)
        if pad_front > 0:
            first = x_ref[pl.ds(0, 1), :].astype(jnp.float32)
            xp_ref[pl.ds(0, pad_front), :] = jnp.broadcast_to(
                first, (pad_front, lanes))
        tail = sl - pad_front - l_in
        if tail > 0:
            last = x_ref[pl.ds(l_in - 1, 1), :].astype(jnp.float32)
            xp_ref[pl.ds(pad_front + l_in, tail), :] = jnp.broadcast_to(
                last, (tail, lanes))

        if mode == "taps":
            # Small k: all window means for this lane tile in k passes.
            acc = xp_ref[pl.ds(0, out_len_p), :]
            for j in range(1, kernel_size):
                acc = acc + xp_ref[pl.ds(j, out_len_p), :]
            work_ref[pl.ds(0, out_len_p), :] = acc * inv_k
        elif mode == "prefix":
            # Inclusive prefix sum computed in place in work_ref via offset
            # slice reads (no full-size concatenate per pass).
            work_ref[pl.ds(0, sl), :] = xp_ref[...]
            shift = 1
            while shift < sl:
                hi = work_ref[pl.ds(shift, sl - shift), :]
                lo = work_ref[pl.ds(0, sl - shift), :]
                work_ref[pl.ds(shift, sl - shift), :] = hi + lo
                shift *= 2
            # Window mean with the exclusive shift folded in:
            #   sum(xp[p : p+k]) = P[p+k-1] - P[p] + xp[p]
            # (the only misaligned reads happen once, here).
            hi = work_ref[pl.ds(kernel_size - 1, out_len_p), :]
            lo = work_ref[pl.ds(0, out_len_p), :]
            x0 = xp_ref[pl.ds(0, out_len_p), :]
            work_ref[pl.ds(0, out_len_p), :] = (hi - lo + x0) * inv_k
            # TODO(synk): for very long L / large-magnitude data, a two-level
            # (per-block local sums + offsets) prefix would bound cancellation.

    if mode == "band":
        step = time_tile * stride
        start = t * step
        if step % 8 == 0:
            start = pl.multiple_of(start, 8)
        w = band_ref.shape[1]
        window = xp_ref[pl.ds(start, w), :]
        # The band already contains 1/k; built once in the wrapper, resident.
        o_ref[...] = jnp.dot(band_ref[...], window,
                             preferred_element_type=jnp.float32
                             ).astype(o_ref.dtype)
    else:
        start = t * time_tile
        if time_tile % 8 == 0:
            start = pl.multiple_of(start, 8)
        o_ref[...] = work_ref[pl.ds(start, time_tile), :].astype(o_ref.dtype)


def moving_avg(x, kernel_size, stride):
    """Moving-average (trend) block matching the PyTorch MovingAvg forward.

    x: (B, L, C).  Returns (B, L_out, C).
    """
    assert kernel_size >= 1 and stride >= 1
    B, L, C = x.shape

    if kernel_size % 2 == 1:
        pad_front = (kernel_size - 1) // 2
        pad_end = (kernel_size - 1) // 2
    else:
        pad_front = kernel_size // 2
        pad_end = 0
    l_pad = L + pad_front + pad_end
    assert l_pad >= kernel_size, "sequence too short for this kernel_size"
    l_out = (l_pad - kernel_size) // stride + 1

    itemsize = jnp.dtype(x.dtype).itemsize
    budget, vmem_limit = _vmem_sizes()

    if stride == 1:
        mode = "taps" if kernel_size <= _TAP_MAX else "prefix"
    else:
        mode = "band"

    # Time tile (multiple of 8, or the full output length).  After the prep the
    # stride==1 hot body is a copy, so big tiles amortize per-grid-step
    # overhead; the band tile is kept smaller so the resident band stays cheap.
    if mode == "band":
        cap = max(8, min(256, (2048 // stride) // 8 * 8))
    else:
        cap = 1024
    time_tile = l_out if l_out <= cap else cap
    n_tt = pl.cdiv(l_out, time_tile)
    out_len_p = n_tt * time_tile           # output rows incl. masked tail

    # Padded-series scratch covers every window read by any (partial) tile.
    sl = max((out_len_p - 1) * stride + kernel_size, pad_front + L)
    sl = _round_up(sl, 8)

    if mode == "band":
        w = (time_tile - 1) * stride + kernel_size
        work_rows = 0
    else:
        w = 0
        work_rows = sl if mode == "prefix" else _round_up(out_len_p, 8)

    def usage(lanes):
        u = 2 * L * lanes * itemsize              # resident input block (x2 buf)
        u += 2 * time_tile * lanes * itemsize     # output block (double-buffered)
        u += sl * lanes * 4                       # padded-series scratch (f32)
        u += 3 * work_rows * lanes * 4            # window-mean scratch + prep temps
        if mode == "band":
            u += 2 * time_tile * w * 4            # resident band matrix
        return u

    band = None
    if mode == "band":
        r = jnp.arange(time_tile, dtype=jnp.int32)[:, None]
        c = jnp.arange(w, dtype=jnp.int32)[None, :]
        band = jnp.where((c >= r * stride) & (c < r * stride + kernel_size),
                         jnp.float32(1.0 / kernel_size), jnp.float32(0.0))

    cost = pl.CostEstimate(
        flops=int(2 * B * C * l_out * kernel_size),
        transcendentals=0,
        bytes_accessed=int(B * L * C * itemsize + B * l_out * C * itemsize))

    kernel = functools.partial(
        _moving_avg_kernel, kernel_size=kernel_size, stride=stride,
        pad_front=pad_front, l_in=L, time_tile=time_tile,
        out_len_p=out_len_p, mode=mode)

    if C >= 128:
        # Native (B, L, C) layout: channels on lanes, no wrapper transposes.
        c_tile = min(_round_up(C, 128), 2048)
        while c_tile > 128 and usage(c_tile) > budget:
            c_tile -= 128
        if c_tile >= C:
            c_tile = C
        n_ct = pl.cdiv(C, c_tile)
        # TODO(synk): if usage(c_tile) still exceeds the budget (very long L),
        # fall back to halo'd time tiling of the input block.

        grid = (B, n_ct, n_tt)
        dims = ("parallel", "parallel", "arbitrary")
        in_specs = [pl.BlockSpec((None, L, c_tile), lambda b, c, t: (b, 0, c))]
        args = [x]
        if mode == "band":
            in_specs.append(pl.BlockSpec((time_tile, w),
                                         lambda b, c, t: (0, 0)))
            args.append(band)
        out_specs = pl.BlockSpec((None, time_tile, c_tile),
                                 lambda b, c, t: (b, t, c))
        scratch_shapes = [pltpu.VMEM((sl, c_tile), jnp.float32)]
        if mode != "band":
            scratch_shapes.append(pltpu.VMEM((work_rows, c_tile), jnp.float32))

        return pl.pallas_call(
            functools.partial(kernel, t_axis=2),
            out_shape=jax.ShapeDtypeStruct((B, l_out, C), x.dtype),
            grid=grid,
            in_specs=in_specs,
            out_specs=out_specs,
            scratch_shapes=scratch_shapes,
            compiler_params=pltpu.CompilerParams(
                dimension_semantics=dims, vmem_limit_bytes=vmem_limit),
            cost_estimate=cost,
        )(*args)

    # Small C: lane-dense relayout (time on sublanes, batch*channel on lanes).
    bc = B * C
    if bc <= 128:
        lane_tile = bc
    else:
        max_lt = min(_round_up(bc, 128), 4096)
        if bc >= 256:
            # Keep >= 2 lane tiles so both v7x TensorCores get work.
            max_lt = min(max_lt, _round_up(pl.cdiv(bc, 2), 128))
        lane_tile = max_lt
        while lane_tile > 128 and usage(lane_tile) > budget:
            lane_tile -= 128
        if lane_tile >= bc:
            lane_tile = bc
    n_lt = pl.cdiv(bc, lane_tile)
    # TODO(synk): if usage(lane_tile) still exceeds the budget (very long L),
    # fall back to halo'd time tiling of the input block.

    x2 = jnp.transpose(x, (1, 0, 2)).reshape(L, bc)

    grid = (n_lt, n_tt)
    dims = ("parallel", "arbitrary")
    in_specs = [pl.BlockSpec((L, lane_tile), lambda i, t: (0, i))]
    args = [x2]
    if mode == "band":
        in_specs.append(pl.BlockSpec((time_tile, w), lambda i, t: (0, 0)))
        args.append(band)
    out_specs = pl.BlockSpec((time_tile, lane_tile), lambda i, t: (t, i))
    scratch_shapes = [pltpu.VMEM((sl, lane_tile), jnp.float32)]
    if mode != "band":
        scratch_shapes.append(pltpu.VMEM((work_rows, lane_tile), jnp.float32))

    y2 = pl.pallas_call(
        functools.partial(kernel, t_axis=1),
        out_shape=jax.ShapeDtypeStruct((l_out, bc), x.dtype),
        grid=grid,
        in_specs=in_specs,
        out_specs=out_specs,
        scratch_shapes=scratch_shapes,
        compiler_params=pltpu.CompilerParams(
            dimension_semantics=dims, vmem_limit_bytes=vmem_limit),
        cost_estimate=cost,
    )(*args)

    return jnp.transpose(y2.reshape(l_out, B, C), (1, 0, 2))


def _moving_avg_ref(x, kernel_size, stride):
    """Pure-JAX reference mirroring the PyTorch forward."""
    if kernel_size % 2 == 1:
        pad = (kernel_size - 1) // 2
        front = jnp.repeat(x[:, 0:1, :], pad, axis=1)
        end = jnp.repeat(x[:, -1:, :], pad, axis=1)
        xp = jnp.concatenate([front, x, end], axis=1)
    else:
        pad = kernel_size // 2
        front = jnp.repeat(x[:, 0:1, :], pad, axis=1)
        xp = jnp.concatenate([front, x], axis=1)
    l_pad = xp.shape[1]
    l_out = (l_pad - kernel_size) // stride + 1
    cols = [jnp.mean(xp[:, i * stride:i * stride + kernel_size, :], axis=1)
            for i in range(l_out)]
    return jnp.stack(cols, axis=1)


if __name__ == "__main__":
    key = jax.random.PRNGKey(0)

    # (kernel_size, stride, B, L, C): exercises taps (small k, stride 1),
    # prefix (large k), band/MXU (stride > 1), and both layouts
    # (C < 128 lane-dense relayout vs native (B, L, C) when C >= 128).
    cases = [(5, 1, 2, 16, 8),
             (25, 1, 2, 64, 8),
             (4, 2, 2, 32, 8),
             (7, 1, 2, 16, 128),
             (6, 3, 2, 16, 128)]

    for kernel_size, stride, B, L, C in cases:
        key, sub = jax.random.split(key)
        x = jax.random.normal(sub, (B, L, C), dtype=jnp.float32)

        out = jax.block_until_ready(moving_avg(x, kernel_size, stride))
        ref = _moving_avg_ref(x, kernel_size, stride)

        assert out.shape == ref.shape, (kernel_size, stride, out.shape, ref.shape)
        assert jnp.allclose(out, ref, atol=1e-5, rtol=1e-4), (
            kernel_size, stride, float(jnp.max(jnp.abs(out - ref))))

    print("KERNEL_OK")
</pallas_src>

<mosaic_0001>
module attributes {stable_mosaic.version = 11 : i64} {
  func.func @_moving_avg_kernel(%arg0: i32, %arg1: i32, %arg2: memref<16x16xf32, #tpu.memory_space<vmem>>, %arg3: memref<16x16xf32, #tpu.memory_space<vmem>>, %arg4: memref<24x16xf32, #tpu.memory_space<vmem>>, %arg5: memref<16x16xf32, #tpu.memory_space<vmem>>) attributes {dimension_semantics = [#tpu.dimension_semantics<parallel>, #tpu.dimension_semantics<arbitrary>], iteration_bounds = array<i64: 1, 1>, scalar_prefetch = 0 : i64, scratch_operands = 2 : i64, tpu.core_type = #tpu.core_type<tc>, window_params = [{transform_indices = @transform_0, window_bounds = array<i64: 16, 16>}, {transform_indices = @transform_1, window_bounds = array<i64: 16, 16>}]} {
    %c0_i32 = arith.constant 0 : i32
    %0 = arith.cmpi eq, %arg1, %c0_i32 : i32
    %1 = arith.extui %0 : i1 to i32
    %c0_i32_0 = arith.constant 0 : i32
    %2 = arith.cmpi ne, %1, %c0_i32_0 : i32
    scf.if %2 {
      %c0_3 = arith.constant 0 : index
      %c0_4 = arith.constant 0 : index
      %8 = vector.load %arg2[%c0_3, %c0_4] : memref<16x16xf32, #tpu.memory_space<vmem>>, vector<16x16xf32>
      %c2 = arith.constant 2 : index
      %c0_5 = arith.constant 0 : index
      %9 = vector.load %arg4[%c2, %c0_5] : memref<24x16xf32, #tpu.memory_space<vmem>>, vector<16x16xf32>
      tpu.vector_store %arg4[%c2, %c0_5], %8 {strides = array<i32>} : memref<24x16xf32, #tpu.memory_space<vmem>>, vector<16x16xf32>,
      %c0_6 = arith.constant 0 : index
      %c0_7 = arith.constant 0 : index
      %10 = vector.load %arg2[%c0_6, %c0_7] : memref<16x16xf32, #tpu.memory_space<vmem>>, vector<1x16xf32>
      %11 = vector.shape_cast %10 : vector<1x16xf32> to vector<1x16xf32>
      %12 = vector.broadcast %11 : vector<1x16xf32> to vector<2x16xf32>
      %c0_8 = arith.constant 0 : index
      %c0_9 = arith.constant 0 : index
      %13 = vector.load %arg4[%c0_8, %c0_9] : memref<24x16xf32, #tpu.memory_space<vmem>>, vector<2x16xf32>
      tpu.vector_store %arg4[%c0_8, %c0_9], %12 {strides = array<i32>} : memref<24x16xf32, #tpu.memory_space<vmem>>, vector<2x16xf32>,
      %c15 = arith.constant 15 : index
      %c0_10 = arith.constant 0 : index
      %14 = vector.load %arg2[%c15, %c0_10] : memref<16x16xf32, #tpu.memory_space<vmem>>, vector<1x16xf32>
      %15 = vector.shape_cast %14 : vector<1x16xf32> to vector<1x16xf32>
      %16 = vector.broadcast %15 : vector<1x16xf32> to vector<6x16xf32>
      %c18 = arith.constant 18 : index
      %c0_11 = arith.constant 0 : index
      %17 = vector.load %arg4[%c18, %c0_11] : memref<24x16xf32, #tpu.memory_space<vmem>>, vector<6x16xf32>
      tpu.vector_store %arg4[%c18, %c0_11], %16 {strides = array<i32>} : memref<24x16xf32, #tpu.memory_space<vmem>>, vector<6x16xf32>,
      %c0_12 = arith.constant 0 : index
      %c0_13 = arith.constant 0 : index
      %18 = vector.load %arg4[%c0_12, %c0_13] : memref<24x16xf32, #tpu.memory_space<vmem>>, vector<16x16xf32>
      %c1 = arith.constant 1 : index
      %c0_14 = arith.constant 0 : index
      %19 = vector.load %arg4[%c1, %c0_14] : memref<24x16xf32, #tpu.memory_space<vmem>>, vector<16x16xf32>
      %20 = arith.addf %18, %19 : vector<16x16xf32>
      %c2_15 = arith.constant 2 : index
      %c0_16 = arith.constant 0 : index
      %21 = vector.load %arg4[%c2_15, %c0_16] : memref<24x16xf32, #tpu.memory_space<vmem>>, vector<16x16xf32>
      %22 = arith.addf %20, %21 : vector<16x16xf32>
      %c3 = arith.constant 3 : index
      %c0_17 = arith.constant 0 : index
      %23 = vector.load %arg4[%c3, %c0_17] : memref<24x16xf32, #tpu.memory_space<vmem>>, vector<16x16xf32>
      %24 = arith.addf %22, %23 : vector<16x16xf32>
      %c4 = arith.constant 4 : index
      %c0_18 = arith.constant 0 : index
      %25 = vector.load %arg4[%c4, %c0_18] : memref<24x16xf32, #tpu.memory_space<vmem>>, vector<16x16xf32>
      %26 = arith.addf %24, %25 : vector<16x16xf32>
      %cst = arith.constant 2.000000e-01 : f32
      %27 = vector.broadcast %cst : f32 to vector<16x16xf32>
      %28 = arith.mulf %26, %27 : vector<16x16xf32>
      %c0_19 = arith.constant 0 : index
      %c0_20 = arith.constant 0 : index
      %29 = vector.load %arg5[%c0_19, %c0_20] : memref<16x16xf32, #tpu.memory_space<vmem>>, vector<16x16xf32>
      tpu.vector_store %arg5[%c0_19, %c0_20], %28 {strides = array<i32>} : memref<16x16xf32, #tpu.memory_space<vmem>>, vector<16x16xf32>,
    } else {
    }
    %c16_i32 = arith.constant 16 : i32
    %3 = arith.muli %arg1, %c16_i32 : i32
    %4 = tpu.assume_multiple %3, 8 : i32
    %5 = arith.index_cast %4 : i32 to index
    %c0 = arith.constant 0 : index
    %6 = vector.load %arg5[%5, %c0] : memref<16x16xf32, #tpu.memory_space<vmem>>, vector<16x16xf32>
    %c0_1 = arith.constant 0 : index
    %c0_2 = arith.constant 0 : index
    %7 = vector.load %arg3[%c0_1, %c0_2] : memref<16x16xf32, #tpu.memory_space<vmem>>, vector<16x16xf32>
    tpu.vector_store %arg3[%c0_1, %c0_2], %6 {strides = array<i32>} : memref<16x16xf32, #tpu.memory_space<vmem>>, vector<16x16xf32>,
    return
  }
  func.func @transform_0(%arg0: i32, %arg1: i32) -> (i32, i32) {
    %c0_i32 = arith.constant 0 : i32
    %c0_i32_0 = arith.constant 0 : i32
    return %c0_i32, %arg0 : i32, i32
  }
  func.func @transform_1(%arg0: i32, %arg1: i32) -> (i32, i32) {
    %c0_i32 = arith.constant 0 : i32
    return %arg1, %arg0 : i32, i32
  }
}

</mosaic_0001>

<llo_original>
// kernel: tpu_custom_call.1
$region0: #{tpu_custom_call.1}
  #allocation0 [shape = 'u32[]', space=smem, size = 0x4, offset = 0x4, fixed_abs, tag = 'smem constant byte address 0x4 - core index']
  #allocation1 [shape = 'u32[144,128]{1,0:T(1,128)}', space=vmem, size = 0x12000, scoped, tag = 'internal scratch']
  #allocation2 [shape = 'f32[24,16]{1,0:T(8,128)}', space=vmem, size = 0x3000, scoped, tag = 'scratch operand']
  #allocation3 [shape = 'f32[16,16]{1,0:T(8,128)}', space=vmem, size = 0x2000, scoped, tag = 'scratch operand']
  %s0 = inlined_call_operand.hbm [shape: f32[16,16], index: 0, kind: input, shape index: {}]
  %s1 = inlined_call_operand.hbm [shape: f32[16,16], index: 1, kind: output, shape index: {}]
  %s2 = sld [smem:[#allocation0]]
  $region22: #{tpu_custom_call.1} parent=0
    _
  %s4 = ssub.s32 1, %s2
  %s5 = scalar_select 0, %s4, %s2
  $region1: #{tpu_custom_call.1} parent=0
    #allocation4 [shape = 'u8[8192]{0}', space=vmem, size = 0x2000, scoped, tag = 'input window, operand 0, single buffered']
    #allocation5 [shape = 's32[1]{0}', space=sflag, size = 0x4, scoped, tag = 'scoped memory for tpu_custom_call.1']
    #allocation6 [shape = 's32[1]{0}', space=sflag, size = 0x4, scoped, tag = 'scoped memory for tpu_custom_call.1']
    #allocation7 [shape = 'u8[8192]{0}', space=vmem, size = 0x2000, scoped, tag = 'output window, operand 0, single buffered']
    %6 = vsyncpa [#allocation5], 0
    %7 = vsyncpa [#allocation6], 0
    // Predicated region
    $region2: #{tpu_custom_call.1} parent=1 // pred_check
      _
    $region3: #{tpu_custom_call.1} parent=1 // pred_check_branch
      %9 = sbr.rel (0) target = $region5
    $region4: #{tpu_custom_call.1} parent=1 // pred_region
      %s11 = ssub.s32 256, 256
      %12 = vsyncadd [#allocation5], %s11
      %s13 = sshll.u32 [#allocation4], 4
      %s14 = int_to_ptr.vmem [resolvable:$true] %s13
      %19 = dma.hbm_to_vmem [thread:$0]  %s0, 256, %s14, [#allocation5], 128, 128, 8
    $region5: #{tpu_custom_call.1} parent=1 // pred_fallthru
      _
    // Predicated region
    $region6: #{tpu_custom_call.1} parent=1 // pred_check
      _
    $region7: #{tpu_custom_call.1} parent=1 // pred_check_branch
      %21 = sbr.rel (0) target = $region9
    $region8: #{tpu_custom_call.1} parent=1 // pred_region
      %22 = dma.done [#allocation5], 256
    $region9: #{tpu_custom_call.1} parent=1 // pred_fallthru
      _
    %p23 = scmp.eq.s32.totalorder 0, 0
    // Predicated region
    $region10: #{tpu_custom_call.1} parent=1 // pred_check
      %p24 = pneg %p23
    $region11: #{tpu_custom_call.1} parent=1 // pred_check_branch
      %26 = sbr.rel (%p24) target = $region13
    $region12: #{tpu_custom_call.1} parent=1 // pred_region
      %v27 = vld [vmem:[#allocation4] sm:$0xff]
      %v28 = vld [vmem:[#allocation4 + $0x8] sm:$0xff]
      %vm29 = vcmask 130048
      %30 = vst.msk [vmem:[#allocation2 + $0x2] sm:$0xff] %vm29, %v27
      %31 = vst.msk [vmem:[#allocation2 + $0xa] sm:$0xff] %vm29, %v28
      %v32 = vld [vmem:[#allocation4] sm:$0x1]
      %v33 = vlaneseq
      %v34 = vshrl.u32 %v33, 7
      %v35 = vsub.s32 0, %v34
      %v36 = vrot.slane %v32, %v35
      %vm37 = vcmask 123904
      %38 = vst.msk [vmem:[#allocation2] sm:$0x3] %vm37, %v36
      %v39 = vld [vmem:[#allocation4 + $0xf] sm:$0x1]
      %v40 = vlaneseq
      %v41 = vshrl.u32 %v40, 7
      %v42 = vsub.s32 0, %v41
      %v43 = vrot.slane %v39, %v42
      %vm44 = vcmask 128000
      %45 = vst.msk [vmem:[#allocation2 + $0x12] sm:$0x3f] %vm44, %v43
      %v46 = vld [vmem:[#allocation2] sm:$0xff]
      %v47 = vld [vmem:[#allocation2 + $0x8] sm:$0xff]
      %v48 = vld [vmem:[#allocation2 + $0x1] sm:$0xff]
      %v49 = vld [vmem:[#allocation2 + $0x9] sm:$0xff]
      %v50 = vadd.f32 %v46, %v48
      %v51 = vadd.f32 %v47, %v49
      %v52 = vld [vmem:[#allocation2 + $0x2] sm:$0xff]
      %v53 = vld [vmem:[#allocation2 + $0xa] sm:$0xff]
      %v54 = vadd.f32 %v50, %v52
      %v55 = vadd.f32 %v51, %v53
      %v56 = vld [vmem:[#allocation2 + $0x3] sm:$0xff]
      %v57 = vld [vmem:[#allocation2 + $0xb] sm:$0xff]
      %v58 = vadd.f32 %v54, %v56
      %v59 = vadd.f32 %v55, %v57
      %v60 = vld [vmem:[#allocation2 + $0x4] sm:$0xff]
      %v61 = vld [vmem:[#allocation2 + $0xc] sm:$0xff]
      %v62 = vadd.f32 %v58, %v60
      %v63 = vadd.f32 %v59, %v61
      %v64 = vmul.f32 %v62, 0.2
      %v65 = vmul.f32 %v63, 0.2
      %66 = vst.msk [vmem:[#allocation3] sm:$0xff] %vm29, %v64
      %67 = vst.msk [vmem:[#allocation3 + $0x8] sm:$0xff] %vm29, %v65
    $region13: #{tpu_custom_call.1} parent=1 // pred_fallthru
      _
    %s68 = smul.u32 0, 16
    %s69 = scalar_lea.vmem [#allocation3], %s68
    %v70 = vld [vmem:[%s69] sm:$0xff]
    %v71 = vld [vmem:[%s69 + $0x8] sm:$0xff]
    %vm72 = vcmask 130048
    %73 = vst.msk [vmem:[#allocation7] sm:$0xff] %vm72, %v70
    %74 = vst.msk [vmem:[#allocation7 + $0x8] sm:$0xff] %vm72, %v71
    // Predicated region
    $region14: #{tpu_custom_call.1} parent=1 // pred_check
      _
    $region15: #{tpu_custom_call.1} parent=1 // pred_check_branch
      %76 = sbr.rel (0) target = $region17
    $region16: #{tpu_custom_call.1} parent=1 // pred_region
      %s78 = ssub.s32 256, 256
      %79 = vsyncadd [#allocation6], %s78
      %s80 = sshll.u32 [#allocation7], 4
      %s81 = int_to_ptr.vmem [resolvable:$true] %s80
      %86 = dma.vmem_to_hbm [thread:$0]  %s81, 256, %s1, [#allocation6], 128, 128, 8
    $region17: #{tpu_custom_call.1} parent=1 // pred_fallthru
      _
    // Predicated region
    $region18: #{tpu_custom_call.1} parent=1 // pred_check
      _
    $region19: #{tpu_custom_call.1} parent=1 // pred_check_branch
      %88 = sbr.rel (0) target = $region21
    $region20: #{tpu_custom_call.1} parent=1 // pred_region
      %89 = dma.done [#allocation6], 256
    $region21: #{tpu_custom_call.1} parent=1 // pred_fallthru
      _
    %90 = vsyncpa [#allocation5], 1
    %91 = vsyncpa [#allocation6], 1

</llo_original>
